<compile_context>
chip_gen: v7x
topology: tpu7x:2x2x1
jax: 0.10.0
libtpu: 0.0.40
codegen_flags: <defaults>
</compile_context>

<pallas_src>
import jax
import jax.numpy as jnp
from jax import lax
from jax.experimental import pallas as pl
from jax.experimental.pallas import tpu as pltpu

BN_EPS = 1e-5
VMEM_LIMIT = 32 * 1024 * 1024


# ----------------------------- Pallas kernels ------------------------------ #

def _bn_stats_kernel(x_ref, sum_ref, ssq_ref):
    """Accumulate per-channel sum and sum-of-squares over all (b, tile) steps.

    x_ref:   (Cin, tw) f32 tile (batch dim squeezed by the BlockSpec)
    sum_ref: (Cin, 1)  f32 accumulator (resident across the whole grid)
    ssq_ref: (Cin, 1)  f32 accumulator
    """
    @pl.when(jnp.logical_and(pl.program_id(0) == 0, pl.program_id(1) == 0))
    def _():
        sum_ref[...] = jnp.zeros_like(sum_ref)
        ssq_ref[...] = jnp.zeros_like(ssq_ref)

    x = x_ref[...]
    sum_ref[...] += jnp.sum(x, axis=1, keepdims=True)
    # NOTE: single-pass E[x^2]-mean^2 in f32 (clamped >= 0 outside); adequate
    # for activations of this scale, accumulation stays in f32.
    ssq_ref[...] += jnp.sum(x * x, axis=1, keepdims=True)


def _bn_relu_conv1x1_kernel(x_ref, scale_ref, shift_ref, w_ref, o_ref):
    """Fused (x*scale + shift) -> ReLU -> (Cout,Cin)@(Cin,tw) matmul.

    x_ref:     (Cin, tw)  f32
    scale_ref: (Cin, 1)   f32   (gamma * rsqrt(var+eps), pre-folded)
    shift_ref: (Cin, 1)   f32   (beta - mean*scale, pre-folded)
    w_ref:     (Cout,Cin) bf16  (1x1 conv weight, bias=False)
    o_ref:     (Cout, tw) f32
    """
    y = jnp.maximum(x_ref[...] * scale_ref[...] + shift_ref[...], 0.0)
    o_ref[...] = jnp.dot(w_ref[...], y.astype(jnp.bfloat16),
                         preferred_element_type=jnp.float32)


# ------------------------------ host wrapper ------------------------------- #

def _pick_spatial_tile(hw, max_tile=2048):
    """Largest lane tile that divides hw and is a multiple of 128 (else hw)."""
    if hw <= max_tile:
        return hw
    t = (max_tile // 128) * 128
    while t >= 128:
        if hw % t == 0:
            return t
        t -= 128
    return hw


def transition_layer_forward(x, params):
    """x: (B, Cin, H, W) NCHW.  params: w (Cout,Cin), gamma (Cin,), beta (Cin,)."""
    B, Cin, H, W = x.shape
    w = params["w"]
    gamma = params["gamma"]
    beta = params["beta"]
    Cout = w.shape[0]
    HW = H * W

    xf = x.astype(jnp.float32).reshape(B, Cin, HW)   # free reshape, no transpose
    tw = _pick_spatial_tile(HW)
    assert HW % tw == 0
    grid = (B, HW // tw)

    # ---- pass 1: per-channel batch statistics (training-mode BatchNorm) ----
    s, ss = pl.pallas_call(
        _bn_stats_kernel,
        out_shape=(jax.ShapeDtypeStruct((Cin, 1), jnp.float32),
                   jax.ShapeDtypeStruct((Cin, 1), jnp.float32)),
        grid=grid,
        in_specs=[pl.BlockSpec((None, Cin, tw), lambda b, t: (b, 0, t))],
        out_specs=(pl.BlockSpec((Cin, 1), lambda b, t: (0, 0)),
                   pl.BlockSpec((Cin, 1), lambda b, t: (0, 0))),
        compiler_params=pltpu.CompilerParams(
            dimension_semantics=("arbitrary", "arbitrary"),
            vmem_limit_bytes=VMEM_LIMIT),
    )(xf)

    count = float(B * HW)
    mean = s / count
    var = jnp.maximum(ss / count - mean * mean, 0.0)        # biased variance
    scale = gamma.reshape(Cin, 1).astype(jnp.float32) * lax.rsqrt(var + BN_EPS)
    shift = beta.reshape(Cin, 1).astype(jnp.float32) - mean * scale

    # ---- pass 2: fused normalize + ReLU + 1x1 conv (matmul) ----------------
    out = pl.pallas_call(
        _bn_relu_conv1x1_kernel,
        out_shape=jax.ShapeDtypeStruct((B, Cout, HW), jnp.float32),
        grid=grid,
        in_specs=[pl.BlockSpec((None, Cin, tw), lambda b, t: (b, 0, t)),
                  pl.BlockSpec((Cin, 1), lambda b, t: (0, 0)),
                  pl.BlockSpec((Cin, 1), lambda b, t: (0, 0)),
                  pl.BlockSpec((Cout, Cin), lambda b, t: (0, 0))],
        out_specs=pl.BlockSpec((None, Cout, tw), lambda b, t: (b, 0, t)),
        compiler_params=pltpu.CompilerParams(
            dimension_semantics=("parallel", "parallel"),
            vmem_limit_bytes=VMEM_LIMIT),
    )(xf, scale, shift, w.astype(jnp.bfloat16))

    return out.reshape(B, Cout, H, W)


# ------------------------- pure-JAX reference (f32) ------------------------- #

def transition_layer_forward_ref(x, params):
    w = params["w"].astype(jnp.float32)
    gamma = params["gamma"].astype(jnp.float32)
    beta = params["beta"].astype(jnp.float32)
    xf = x.astype(jnp.float32)
    mean = jnp.mean(xf, axis=(0, 2, 3), keepdims=True)
    var = jnp.mean((xf - mean) ** 2, axis=(0, 2, 3), keepdims=True)
    y = (xf - mean) * lax.rsqrt(var + BN_EPS)
    y = y * gamma.reshape(1, -1, 1, 1) + beta.reshape(1, -1, 1, 1)
    y = jnp.maximum(y, 0.0)                                   # ReLU
    return jnp.einsum("oc,bchw->bohw", w, y,                  # 1x1 conv, no bias
                      precision=lax.Precision.HIGHEST)


if __name__ == "__main__":
    B, Cin, Cout, H, W = 2, 64, 32, 16, 16
    key = jax.random.PRNGKey(0)
    kx, kw, kg, kb = jax.random.split(key, 4)

    x = jax.random.normal(kx, (B, Cin, H, W), jnp.float32)
    params = dict(
        # PyTorch Conv2d(1x1, bias=False) weight (Cout, Cin, 1, 1) -> (Cout, Cin)
        w=(1.0 / jnp.sqrt(Cin)) * jax.random.normal(kw, (Cout, Cin), jnp.float32),
        gamma=1.0 + 0.1 * jax.random.normal(kg, (Cin,), jnp.float32),
        beta=0.1 * jax.random.normal(kb, (Cin,), jnp.float32),
    )

    out = jax.block_until_ready(transition_layer_forward(x, params))
    assert out.shape == (B, Cout, H, W), out.shape
    assert bool(jnp.all(jnp.isfinite(out)))

    ref = jax.block_until_ready(transition_layer_forward_ref(x, params))
    max_err = float(jnp.max(jnp.abs(out - ref)))
    # tolerance sized for bf16 MXU operands with f32 accumulation
    assert max_err < 3e-2, max_err

    print("KERNEL_OK")
</pallas_src>

<mosaic_0001>
module attributes {stable_mosaic.version = 11 : i64} {
  func.func @_bn_stats_kernel(%arg0: i32, %arg1: i32, %arg2: memref<1x64x256xf32, #tpu.memory_space<vmem>>, %arg3: memref<64x1xf32, #tpu.memory_space<vmem>>, %arg4: memref<64x1xf32, #tpu.memory_space<vmem>>) attributes {dimension_semantics = [#tpu.dimension_semantics<arbitrary>, #tpu.dimension_semantics<arbitrary>], iteration_bounds = array<i64: 2, 1>, scalar_prefetch = 0 : i64, scratch_operands = 0 : i64, tpu.core_type = #tpu.core_type<tc>, window_params = [{transform_indices = @transform_0, window_bounds = array<i64: 1, 64, 256>}, {pipeline_mode = #tpu.pipeline_mode<synchronous>, transform_indices = @transform_1, window_bounds = array<i64: 64, 1>}, {pipeline_mode = #tpu.pipeline_mode<synchronous>, transform_indices = @transform_2, window_bounds = array<i64: 64, 1>}]} {
    %c0_i32 = arith.constant 0 : i32
    %0 = arith.cmpi eq, %arg0, %c0_i32 : i32
    %c0_i32_0 = arith.constant 0 : i32
    %1 = arith.cmpi eq, %arg1, %c0_i32_0 : i32
    %2 = arith.andi %0, %1 : i1
    %3 = arith.extui %2 : i1 to i32
    %c0_i32_1 = arith.constant 0 : i32
    %4 = arith.cmpi ne, %3, %c0_i32_1 : i32
    scf.if %4 {
      %cst_13 = arith.constant 0.000000e+00 : f32
      %18 = vector.broadcast %cst_13 : f32 to vector<64x1xf32>
      %c0_14 = arith.constant 0 : index
      %c0_15 = arith.constant 0 : index
      %19 = vector.load %arg3[%c0_14, %c0_15] : memref<64x1xf32, #tpu.memory_space<vmem>>, vector<64x1xf32>
      tpu.vector_store %arg3[%c0_14, %c0_15], %18 {strides = array<i32>} : memref<64x1xf32, #tpu.memory_space<vmem>>, vector<64x1xf32>,
      %cst_16 = arith.constant 0.000000e+00 : f32
      %20 = vector.broadcast %cst_16 : f32 to vector<64x1xf32>
      %c0_17 = arith.constant 0 : index
      %c0_18 = arith.constant 0 : index
      %21 = vector.load %arg4[%c0_17, %c0_18] : memref<64x1xf32, #tpu.memory_space<vmem>>, vector<64x1xf32>
      tpu.vector_store %arg4[%c0_17, %c0_18], %20 {strides = array<i32>} : memref<64x1xf32, #tpu.memory_space<vmem>>, vector<64x1xf32>,
    } else {
    }
    %c0 = arith.constant 0 : index
    %c0_2 = arith.constant 0 : index
    %c0_3 = arith.constant 0 : index
    %5 = vector.load %arg2[%c0, %c0_2, %c0_3] : memref<1x64x256xf32, #tpu.memory_space<vmem>>, vector<1x64x256xf32>
    %6 = vector.shape_cast %5 : vector<1x64x256xf32> to vector<64x256xf32>
    %c0_4 = arith.constant 0 : index
    %c0_5 = arith.constant 0 : index
    %7 = vector.load %arg3[%c0_4, %c0_5] : memref<64x1xf32, #tpu.memory_space<vmem>>, vector<64x1xf32>
    %cst = arith.constant dense<0.000000e+00> : vector<64xf32>
    %8 = vector.multi_reduction <add>, %6, %cst [1] : vector<64x256xf32> to vector<64xf32>
    %9 = vector.shape_cast %8 : vector<64xf32> to vector<64x1xf32>
    %10 = arith.addf %7, %9 : vector<64x1xf32>
    %c0_6 = arith.constant 0 : index
    %c0_7 = arith.constant 0 : index
    %11 = vector.load %arg3[%c0_6, %c0_7] : memref<64x1xf32, #tpu.memory_space<vmem>>, vector<64x1xf32>
    tpu.vector_store %arg3[%c0_6, %c0_7], %10 {strides = array<i32>} : memref<64x1xf32, #tpu.memory_space<vmem>>, vector<64x1xf32>,
    %c0_8 = arith.constant 0 : index
    %c0_9 = arith.constant 0 : index
    %12 = vector.load %arg4[%c0_8, %c0_9] : memref<64x1xf32, #tpu.memory_space<vmem>>, vector<64x1xf32>
    %13 = arith.mulf %6, %6 : vector<64x256xf32>
    %cst_10 = arith.constant dense<0.000000e+00> : vector<64xf32>
    %14 = vector.multi_reduction <add>, %13, %cst_10 [1] : vector<64x256xf32> to vector<64xf32>
    %15 = vector.shape_cast %14 : vector<64xf32> to vector<64x1xf32>
    %16 = arith.addf %12, %15 : vector<64x1xf32>
    %c0_11 = arith.constant 0 : index
    %c0_12 = arith.constant 0 : index
    %17 = vector.load %arg4[%c0_11, %c0_12] : memref<64x1xf32, #tpu.memory_space<vmem>>, vector<64x1xf32>
    tpu.vector_store %arg4[%c0_11, %c0_12], %16 {strides = array<i32>} : memref<64x1xf32, #tpu.memory_space<vmem>>, vector<64x1xf32>,
    return
  }
  func.func @transform_0(%arg0: i32, %arg1: i32) -> (i32, i32, i32) {
    %c0_i32 = arith.constant 0 : i32
    %c0_i32_0 = arith.constant 0 : i32
    return %arg0, %c0_i32, %arg1 : i32, i32, i32
  }
  func.func @transform_1(%arg0: i32, %arg1: i32) -> (i32, i32) {
    %c0_i32 = arith.constant 0 : i32
    %c0_i32_0 = arith.constant 0 : i32
    %c0_i32_1 = arith.constant 0 : i32
    return %c0_i32, %c0_i32_0 : i32, i32
  }
  func.func @transform_2(%arg0: i32, %arg1: i32) -> (i32, i32) {
    %c0_i32 = arith.constant 0 : i32
    %c0_i32_0 = arith.constant 0 : i32
    %c0_i32_1 = arith.constant 0 : i32
    return %c0_i32, %c0_i32_0 : i32, i32
  }
}

</mosaic_0001>

<llo_original>
// kernel: tpu_custom_call.1
$region0: #{tpu_custom_call.1}
  #allocation0 [shape = 'u32[]', space=smem, size = 0x4, offset = 0x4, fixed_abs, tag = 'smem constant byte address 0x4 - core index']
  #allocation1 [shape = 'u32[144,128]{1,0:T(1,128)}', space=vmem, size = 0x12000, scoped, tag = 'internal scratch']
  %s0 = inlined_call_operand.hbm [shape: f32[2,64,256], index: 0, kind: input, shape index: {}]
  %s1 = inlined_call_operand.vmem [shape: f32[64,1], index: 1, kind: output, shape index: {0}]
  %s2 = inlined_call_operand.vmem [shape: f32[64,1], index: 2, kind: output, shape index: {1}]
  %3 = xla_tuple %s1, %s2
  %s4 = sld [smem:[#allocation0]]
  $region53: #{tpu_custom_call.1} parent=0
    _
  %s6 = ssub.s32 1, %s4
  %s7 = scalar_select 0, %s6, %s4
  $region1: #{tpu_custom_call.1} parent=0
    #allocation2 [shape = 'u8[131072]{0}', space=vmem, size = 0x20000, scoped, tag = 'input window, operand 0']
    #allocation3 [shape = 's32[2]{0}', space=sflag, size = 0x8, scoped, tag = 'scoped memory for tpu_custom_call.1']
    %8 = vsyncpa [#allocation3], 0
    %s9 = scalar_lea.sflag [#allocation3], 1
    %10 = vsyncpa %s9, 0
    loop: start=0, step=1, limit=4
    $region2: #{tpu_custom_call.1} parent=1 // loop_pre_header
      _
    $region3: #{tpu_custom_call.1} parent=1 // loop_header
      %s12 = sphi 0, %s16
      %p13 = scmp.ge.s32.totalorder %s12, 4
      %s19 = sphi 0, %s31
      %s20 = sphi 0, %s27
      %s21 = sphi 0, %s19
      %s22 = sphi 0, %s20
      %s23 = sphi 0, %s21
      %s24 = sphi 0, %s22
      %s36 = sphi 0, %s38
      %s39 = sphi 0, %s36
      %s40 = sphi 0, %s39
      %s56 = sphi 0, %s40
      %s60 = sphi 0, %s60
      %s62 = sphi 0, %s60
      %s63 = sphi 0, %s62
      %s77 = sphi 0, %s63
      %s81 = sphi 0, %s81
      %s83 = sphi 0, %s81
      %s84 = sphi 0, %s83
      %s98 = sphi 0, %s84
    $region4: #{tpu_custom_call.1} parent=1 // loop_header_branch
      %15 = sbr.rel (%p13) target = $region8
    $region5: #{tpu_custom_call.1} parent=1 // loop_body
      %s17 = ssub.s32 %s12, 1
      %s18 = ssub.s32 %s12, 2
      %s25 = sadd.s32 1, %s20
      %p26 = scmp.ge.s32.totalorder %s25, 1
      %s27 = scalar_select %p26, 0, %s25
      %s28 = sadd.s32 1, %s19
      %s29 = scalar_select %p26, %s28, %s19
      %p30 = scmp.ge.s32.totalorder %s29, 2
      %s31 = scalar_select %p30, 0, %s29
      %s32 = ssub.s32 %s19, %s31
      %s33 = ssub.s32 %s20, %s27
      %s34 = sor.u32 %s32, %s33
      %p35 = scmp.eq.s32.totalorder %s34, 0
      %s37 = sadd.s32 %s36, 1
      %s38 = scalar_select %p35, %s36, %s37
      %p41 = pneg %p35
      %p42 = scmp.eq.s32.totalorder %s12, 1
      %p43 = por %p41, %p42
      %p44 = scmp.ne.s32.totalorder %s36, %s39
      %p45 = scmp.eq.s32.totalorder %s12, 0
      %p46 = por %p44, %p45
      %p47 = scmp.ne.s32.totalorder %s36, %s39
      %p48 = scmp.eq.s32.totalorder %s17, 1
      %p49 = por %p47, %p48
      %p50 = scmp.ne.s32.totalorder %s39, %s40
      %p51 = scmp.eq.s32.totalorder %s17, 0
      %p52 = por %p50, %p51
      %p53 = scmp.ne.s32.totalorder %s39, %s40
      %p54 = scmp.eq.s32.totalorder %s18, 1
      %p55 = por %p53, %p54
      %p57 = scmp.ne.s32.totalorder %s40, %s56
      %p58 = scmp.eq.s32.totalorder %s18, 0
      %p59 = por %p57, %p58
      %s61 = sadd.s32 %s60, 1
      %p64 = scmp.eq.s32.totalorder %s12, 1
      %p65 = scmp.ne.s32.totalorder %s60, %s62
      %p66 = scmp.eq.s32.totalorder %s12, 0
      %p67 = por %p65, %p66
      %p68 = scmp.ne.s32.totalorder %s60, %s62
      %p69 = scmp.eq.s32.totalorder %s17, 1
      %p70 = por %p68, %p69
      %p71 = scmp.ne.s32.totalorder %s62, %s63
      %p72 = scmp.eq.s32.totalorder %s17, 0
      %p73 = por %p71, %p72
      %p74 = scmp.ne.s32.totalorder %s62, %s63
      %p75 = scmp.eq.s32.totalorder %s18, 1
      %p76 = por %p74, %p75
      %p78 = scmp.ne.s32.totalorder %s63, %s77
      %p79 = scmp.eq.s32.totalorder %s18, 0
      %p80 = por %p78, %p79
      %s82 = sadd.s32 %s81, 1
      %p85 = scmp.eq.s32.totalorder %s12, 1
      %p86 = scmp.ne.s32.totalorder %s81, %s83
      %p87 = scmp.eq.s32.totalorder %s12, 0
      %p88 = por %p86, %p87
      %p89 = scmp.ne.s32.totalorder %s81, %s83
      %p90 = scmp.eq.s32.totalorder %s17, 1
      %p91 = por %p89, %p90
      %p92 = scmp.ne.s32.totalorder %s83, %s84
      %p93 = scmp.eq.s32.totalorder %s17, 0
      %p94 = por %p92, %p93
      %p95 = scmp.ne.s32.totalorder %s83, %s84
      %p96 = scmp.eq.s32.totalorder %s18, 1
      %p97 = por %p95, %p96
      %p99 = scmp.ne.s32.totalorder %s84, %s98
      %p100 = scmp.eq.s32.totalorder %s18, 0
      %p101 = por %p99, %p100
      %p102 = scmp.le.s32.totalorder 1, %s12
      %p103 = scmp.lt.s32.totalorder %s12, 3
      %p104 = pnand %p102, %p103
      %p105 = pneg %p104
      // Predicated region
      $region9: #{tpu_custom_call.1} parent=5 // pred_check
        _
      $region10: #{tpu_custom_call.1} parent=5 // pred_check_branch
        %107 = sbr.rel (%p104) target = $region12
      $region11: #{tpu_custom_call.1} parent=5 // pred_region
        %s108 = ssub.s32 %s12, 1
      $region12: #{tpu_custom_call.1} parent=5 // pred_fallthru
        _
      %p109 = scmp.lt.s32.totalorder %s12, 2
      // Predicated region
      $region13: #{tpu_custom_call.1} parent=5 // pred_check
        %p110 = pneg %p109
      $region14: #{tpu_custom_call.1} parent=5 // pred_check_branch
        %112 = sbr.rel (%p110) target = $region16
      $region15: #{tpu_custom_call.1} parent=5 // pred_region
        // Predicated region
        $region17: #{tpu_custom_call.1} parent=15 // pred_check
          %p113 = pneg %p46
        $region18: #{tpu_custom_call.1} parent=15 // pred_check_branch
          %115 = sbr.rel (%p113) target = $region20
        $region19: #{tpu_custom_call.1} parent=15 // pred_region
          %s116 = sand.u32 %s36, 1
          %s117 = scalar_lea.sflag [#allocation3], %s116
          %s118 = sand.u32 %s36, 1
          %s119 = smul.addr %s118, 128
          %s120 = scalar_lea.vmem [#allocation2], %s119
          %s121 = smul.u32 2, %s20
          %s123 = ssub.s32 2048, 2048
          %124 = vsyncadd %s117, %s123
          %s125 = smul.addr %s19, 16
          %s126 = sadd.s32 %s121, %s125
          %s127 = smul.addr %s126, 128
          %s128 = scalar_lea.hbm %s0, %s127
          %s129 = sshll.u32 %s120, 4
          %s130 = int_to_ptr.vmem [resolvable:$true] %s129
          %135 = dma.hbm_to_vmem [thread:$0]  %s128, 2048, %s130, %s117, 256, 256, 16
        $region20: #{tpu_custom_call.1} parent=15 // pred_fallthru
          _
      $region16: #{tpu_custom_call.1} parent=5 // pred_fallthru
        _
      %p136 = scmp.le.s32.totalorder 1, %s12
      %p137 = scmp.lt.s32.totalorder %s12, 3
      %p138 = pnand %p136, %p137
      %p139 = pneg %p138
      // Predicated region
      $region21: #{tpu_custom_call.1} parent=5 // pred_check
        _
      $region22: #{tpu_custom_call.1} parent=5 // pred_check_branch
        %141 = sbr.rel (%p138) target = $region24
      $region23: #{tpu_custom_call.1} parent=5 // pred_region
        %s142 = ssub.s32 %s12, 1
        %s143 = sand.u32 %s39, 1
        %s144 = scalar_lea.sflag [#allocation3], %s143
        %s145 = sand.u32 %s39, 1
        %s146 = smul.addr %s145, 128
        %s147 = scalar_lea.vmem [#allocation2], %s146
        // Predicated region
        $region25: #{tpu_custom_call.1} parent=23 // pred_check
          %p148 = pneg %p52
        $region26: #{tpu_custom_call.1} parent=23 // pred_check_branch
          %150 = sbr.rel (%p148) target = $region28
        $region27: #{tpu_custom_call.1} parent=23 // pred_region
          %151 = dma.done %s144, 2048
        $region28: #{tpu_custom_call.1} parent=23 // pred_fallthru
          _
        %s152 = sand.u32 %s39, 1
        %s153 = scalar_lea.sflag [#allocation3], %s152
        %s154 = sand.u32 %s39, 1
        %s155 = smul.addr %s154, 128
        %s156 = scalar_lea.vmem [#allocation2], %s155
        %p157 = pneg %p52
        %p158 = pneg %p49
        %p159 = pneg %p73
        %p160 = pneg %p70
        %p161 = pneg %p94
        %p162 = pneg %p91
        %s163 = smul.u32 2, %s22
        %p164 = scmp.eq.s32.totalorder %s21, 0
        %p165 = scmp.eq.s32.totalorder %s22, 0
        %p166 = pnand %p164, %p165
        %p167 = pneg %p166
        // Predicated region
        $region29: #{tpu_custom_call.1} parent=23 // pred_check
          _
        $region30: #{tpu_custom_call.1} parent=23 // pred_check_branch
          %169 = sbr.rel (%p166) target = $region32
        $region31: #{tpu_custom_call.1} parent=23 // pred_region
          %vm170 = vcmask 7168
          %171 = vst.msk [vmem:[%s1] sm:$0xff] %vm170, 0.0
          %172 = vst.msk [vmem:[%s1 + $0x8] sm:$0xff] %vm170, 0.0
          %173 = vst.msk [vmem:[%s1 + $0x10] sm:$0xff] %vm170, 0.0
          %174 = vst.msk [vmem:[%s1 + $0x18] sm:$0xff] %vm170, 0.0
          %175 = vst.msk [vmem:[%s1 + $0x20] sm:$0xff] %vm170, 0.0
          %176 = vst.msk [vmem:[%s1 + $0x28] sm:$0xff] %vm170, 0.0
          %177 = vst.msk [vmem:[%s1 + $0x30] sm:$0xff] %vm170, 0.0
          %178 = vst.msk [vmem:[%s1 + $0x38] sm:$0xff] %vm170, 0.0
          %179 = vst.msk [vmem:[%s2] sm:$0xff] %vm170, 0.0
          %180 = vst.msk [vmem:[%s2 + $0x8] sm:$0xff] %vm170, 0.0
          %181 = vst.msk [vmem:[%s2 + $0x10] sm:$0xff] %vm170, 0.0
          %182 = vst.msk [vmem:[%s2 + $0x18] sm:$0xff] %vm170, 0.0
          %183 = vst.msk [vmem:[%s2 + $0x20] sm:$0xff] %vm170, 0.0
          %184 = vst.msk [vmem:[%s2 + $0x28] sm:$0xff] %vm170, 0.0
          %185 = vst.msk [vmem:[%s2 + $0x30] sm:$0xff] %vm170, 0.0
          %186 = vst.msk [vmem:[%s2 + $0x38] sm:$0xff] %vm170, 0.0
        $region32: #{tpu_custom_call.1} parent=23 // pred_fallthru
          _
        %v187 = vld [vmem:[%s147] sm:$0xff]
        %v188 = vld [vmem:[%s147 + $0x8] sm:$0xff]
        %v189 = vld [vmem:[%s147 + $0x10] sm:$0xff]
        %v190 = vld [vmem:[%s147 + $0x18] sm:$0xff]
        %v191 = vld [vmem:[%s147 + $0x20] sm:$0xff]
        %v192 = vld [vmem:[%s147 + $0x28] sm:$0xff]
        %v193 = vld [vmem:[%s147 + $0x30] sm:$0xff]
        %v194 = vld [vmem:[%s147 + $0x38] sm:$0xff]
        %v195 = vld [vmem:[%s147 + $0x40] sm:$0xff]
        %v196 = vld [vmem:[%s147 + $0x48] sm:$0xff]
        %v197 = vld [vmem:[%s147 + $0x50] sm:$0xff]
        %v198 = vld [vmem:[%s147 + $0x58] sm:$0xff]
        %v199 = vld [vmem:[%s147 + $0x60] sm:$0xff]
        %v200 = vld [vmem:[%s147 + $0x68] sm:$0xff]
        %v201 = vld [vmem:[%s147 + $0x70] sm:$0xff]
        %v202 = vld [vmem:[%s147 + $0x78] sm:$0xff]
        %v203 = vld [vmem:[%s1] sm:$0xff]
        %v204 = vld [vmem:[%s1 + $0x8] sm:$0xff]
        %v205 = vld [vmem:[%s1 + $0x10] sm:$0xff]
        %v206 = vld [vmem:[%s1 + $0x18] sm:$0xff]
        %v207 = vld [vmem:[%s1 + $0x20] sm:$0xff]
        %v208 = vld [vmem:[%s1 + $0x28] sm:$0xff]
        %v209 = vld [vmem:[%s1 + $0x30] sm:$0xff]
        %v210 = vld [vmem:[%s1 + $0x38] sm:$0xff]
        %v211 = vadd.f32 %v187, %v188
        %212 = vadd.xlane.f32.xlu0 %v211
        %v213 = vpop.xlane.xlu0 %212
        %v214 = vadd.f32 %v189, %v190
        %215 = vadd.xlane.f32.xlu0 %v214
        %v216 = vpop.xlane.xlu0 %215
        %v217 = vadd.f32 %v191, %v192
        %218 = vadd.xlane.f32.xlu0 %v217
        %v219 = vpop.xlane.xlu0 %218
        %v220 = vadd.f32 %v193, %v194
        %221 = vadd.xlane.f32.xlu0 %v220
        %v222 = vpop.xlane.xlu0 %221
        %v223 = vadd.f32 %v195, %v196
        %224 = vadd.xlane.f32.xlu0 %v223
        %v225 = vpop.xlane.xlu0 %224
        %v226 = vadd.f32 %v197, %v198
        %227 = vadd.xlane.f32.xlu0 %v226
        %v228 = vpop.xlane.xlu0 %227
        %v229 = vadd.f32 %v199, %v200
        %230 = vadd.xlane.f32.xlu0 %v229
        %v231 = vpop.xlane.xlu0 %230
        %v232 = vadd.f32 %v201, %v202
        %233 = vadd.xlane.f32.xlu0 %v232
        %v234 = vpop.xlane.xlu0 %233
        %v235 = vadd.f32 %v203, %v213
        %v236 = vadd.f32 %v204, %v216
        %v237 = vadd.f32 %v205, %v219
        %v238 = vadd.f32 %v206, %v222
        %v239 = vadd.f32 %v207, %v225
        %v240 = vadd.f32 %v208, %v228
        %v241 = vadd.f32 %v209, %v231
        %v242 = vadd.f32 %v210, %v234
        %vm243 = vcmask 7168
        %244 = vst.msk [vmem:[%s1] sm:$0xff] %vm243, %v235
        %245 = vst.msk [vmem:[%s1 + $0x8] sm:$0xff] %vm243, %v236
        %246 = vst.msk [vmem:[%s1 + $0x10] sm:$0xff] %vm243, %v237
        %247 = vst.msk [vmem:[%s1 + $0x18] sm:$0xff] %vm243, %v238
        %248 = vst.msk [vmem:[%s1 + $0x20] sm:$0xff] %vm243, %v239
        %249 = vst.msk [vmem:[%s1 + $0x28] sm:$0xff] %vm243, %v240
        %250 = vst.msk [vmem:[%s1 + $0x30] sm:$0xff] %vm243, %v241
        %251 = vst.msk [vmem:[%s1 + $0x38] sm:$0xff] %vm243, %v242
        %v252 = vld [vmem:[%s2] sm:$0xff]
        %v253 = vld [vmem:[%s2 + $0x8] sm:$0xff]
        %v254 = vld [vmem:[%s2 + $0x10] sm:$0xff]
        %v255 = vld [vmem:[%s2 + $0x18] sm:$0xff]
        %v256 = vld [vmem:[%s2 + $0x20] sm:$0xff]
        %v257 = vld [vmem:[%s2 + $0x28] sm:$0xff]
        %v258 = vld [vmem:[%s2 + $0x30] sm:$0xff]
        %v259 = vld [vmem:[%s2 + $0x38] sm:$0xff]
        %v260 = vmul.f32 %v187, %v187
        %v261 = vmul.f32 %v188, %v188
        %v262 = vmul.f32 %v189, %v189
        %v263 = vmul.f32 %v190, %v190
        %v264 = vmul.f32 %v191, %v191
        %v265 = vmul.f32 %v192, %v192
        %v266 = vmul.f32 %v193, %v193
        %v267 = vmul.f32 %v194, %v194
        %v268 = vmul.f32 %v195, %v195
        %v269 = vmul.f32 %v196, %v196
        %v270 = vmul.f32 %v197, %v197
        %v271 = vmul.f32 %v198, %v198
        %v272 = vmul.f32 %v199, %v199
        %v273 = vmul.f32 %v200, %v200
        %v274 = vmul.f32 %v201, %v201
        %v275 = vmul.f32 %v202, %v202
        %v276 = vadd.f32 %v260, %v261
        %277 = vadd.xlane.f32.xlu0 %v276
        %v278 = vpop.xlane.xlu0 %277
        %v279 = vadd.f32 %v262, %v263
        %280 = vadd.xlane.f32.xlu0 %v279
        %v281 = vpop.xlane.xlu0 %280
        %v282 = vadd.f32 %v264, %v265
        %283 = vadd.xlane.f32.xlu0 %v282
        %v284 = vpop.xlane.xlu0 %283
        %v285 = vadd.f32 %v266, %v267
        %286 = vadd.xlane.f32.xlu0 %v285
        %v287 = vpop.xlane.xlu0 %286
        %v288 = vadd.f32 %v268, %v269
        %289 = vadd.xlane.f32.xlu0 %v288
        %v290 = vpop.xlane.xlu0 %289
        %v291 = vadd.f32 %v270, %v271
        %292 = vadd.xlane.f32.xlu0 %v291
        %v293 = vpop.xlane.xlu0 %292
        %v294 = vadd.f32 %v272, %v273
        %295 = vadd.xlane.f32.xlu0 %v294
        %v296 = vpop.xlane.xlu0 %295
        %v297 = vadd.f32 %v274, %v275
        %298 = vadd.xlane.f32.xlu0 %v297
        %v299 = vpop.xlane.xlu0 %298
        %v300 = vadd.f32 %v252, %v278
        %v301 = vadd.f32 %v253, %v281
        %v302 = vadd.f32 %v254, %v284
        %v303 = vadd.f32 %v255, %v287
        %v304 = vadd.f32 %v256, %v290
        %v305 = vadd.f32 %v257, %v293
        %v306 = vadd.f32 %v258, %v296
        %v307 = vadd.f32 %v259, %v299
        %308 = vst.msk [vmem:[%s2] sm:$0xff] %vm243, %v300
        %309 = vst.msk [vmem:[%s2 + $0x8] sm:$0xff] %vm243, %v301
        %310 = vst.msk [vmem:[%s2 + $0x10] sm:$0xff] %vm243, %v302
        %311 = vst.msk [vmem:[%s2 + $0x18] sm:$0xff] %vm243, %v303
        %312 = vst.msk [vmem:[%s2 + $0x20] sm:$0xff] %vm243, %v304
        %313 = vst.msk [vmem:[%s2 + $0x28] sm:$0xff] %vm243, %v305
        %314 = vst.msk [vmem:[%s2 + $0x30] sm:$0xff] %vm243, %v306
        %315 = vst.msk [vmem:[%s2 + $0x38] sm:$0xff] %vm243, %v307
        // Predicated region
        $region33: #{tpu_custom_call.1} parent=23 // pred_check
          %p316 = pneg %p70
        $region34: #{tpu_custom_call.1} parent=23 // pred_check_branch
          %318 = sbr.rel (%p316) target = $region36
        $region35: #{tpu_custom_call.1} parent=23 // pred_region
          _
        $region36: #{tpu_custom_call.1} parent=23 // pred_fallthru
          _
        // Predicated region
        $region37: #{tpu_custom_call.1} parent=23 // pred_check
          %p319 = pneg %p91
        $region38: #{tpu_custom_call.1} parent=23 // pred_check_branch
          %321 = sbr.rel (%p319) target = $region40
        $region39: #{tpu_custom_call.1} parent=23 // pred_region
          _
        $region40: #{tpu_custom_call.1} parent=23 // pred_fallthru
          _
        // Predicated region
        $region41: #{tpu_custom_call.1} parent=23 // pred_check
          %p322 = pneg %p70
        $region42: #{tpu_custom_call.1} parent=23 // pred_check_branch
          %324 = sbr.rel (%p322) target = $region44
        $region43: #{tpu_custom_call.1} parent=23 // pred_region
          _
        $region44: #{tpu_custom_call.1} parent=23 // pred_fallthru
          _
        // Predicated region
        $region45: #{tpu_custom_call.1} parent=23 // pred_check
          %p325 = pneg %p91
        $region46: #{tpu_custom_call.1} parent=23 // pred_check_branch
          %327 = sbr.rel (%p325) target = $region48
        $region47: #{tpu_custom_call.1} parent=23 // pred_region
          _
        $region48: #{tpu_custom_call.1} parent=23 // pred_fallthru
          _
      $region24: #{tpu_custom_call.1} parent=5 // pred_fallthru
        _
      %p328 = scmp.le.s32.totalorder 2, %s12
      // Predicated region
      $region49: #{tpu_custom_call.1} parent=5 // pred_check
        %p329 = pneg %p328
      $region50: #{tpu_custom_call.1} parent=5 // pred_check_branch
        %331 = sbr.rel (%p329) target = $region52
      $region51: #{tpu_custom_call.1} parent=5 // pred_region
        %s332 = ssub.s32 %s12, 2
      $region52: #{tpu_custom_call.1} parent=5 // pred_fallthru
        _
    $region6: #{tpu_custom_call.1} parent=1 // loop_footer
      %s16 = sadd.s32 1, %s12
    $region7: #{tpu_custom_call.1} parent=1 // loop_footer_branch
      %11 = sbr.rel target = $region3
    $region8: #{tpu_custom_call.1} parent=1 // loop_exit
      _
    %333 = vsyncpa [#allocation3], 1
    %s334 = scalar_lea.sflag [#allocation3], 1
    %335 = vsyncpa %s334, 1

</llo_original>
